<compile_context>
chip_gen: v5e
topology: v5e:2x2
jax: 0.10.0
libtpu: 0.0.40
codegen_flags: <defaults>
</compile_context>

<pallas_src>
import jax
import jax.numpy as jnp
from jax.experimental import pallas as pl
from jax.experimental.pallas import tpu as pltpu

_LANES = 128


def _sublanes_for(dtype) -> int:
    # Sub-32-bit dtypes pack along sublanes: one vreg holds 8/16/32 rows.
    itemsize = jnp.dtype(dtype).itemsize
    return {4: 8, 2: 16, 1: 32}.get(itemsize, 8)


def linear1x1_kernel(w_ref, b_ref, x_ref, o_ref):
    # w_ref / b_ref are SMEM scalars; one fused multiply-add per vreg.
    o_ref[...] = x_ref[...] * w_ref[0] + b_ref[0]


def linear_forward(x, w, b, *, block_rows=2048, min_kernel_elems=1 << 16,
                   force_kernel=False):
    """x: (N, 1), w: (1, 1), b: (1,) -> (N, 1). Matches nn.Linear(1, 1)."""
    n, in_f = x.shape
    out_f = w.shape[0]
    assert in_f == 1 and out_f == 1, "kernel specialized for Linear(1, 1)"

    # Tiny N: a standalone pallas launch is 100% fixed overhead -> plain XLA.
    if (n < min_kernel_elems) and not force_kernel:
        return x * w[0, 0] + b[0]

    dtype = x.dtype
    sub = _sublanes_for(dtype)

    # Lane-dense layout: flatten; pad only to the next multiple of 128 lanes,
    # and only when actually needed (avoids a full-array HBM copy otherwise).
    xf = x.reshape(-1)
    rows = pl.cdiv(n, _LANES)
    n_pad = rows * _LANES
    padded = n_pad != n
    if padded:
        xf = jnp.pad(xf, (0, n_pad - n))
    x2d = xf.reshape(rows, _LANES)

    # Block: either the whole array (any row count is legal as a full-extent
    # block) or a sublane-aligned tile; Pallas masks the ragged last block.
    if rows <= block_rows:
        br = rows
    else:
        br = (block_rows // sub) * sub
    grid = (pl.cdiv(rows, br),)

    w1d = w.reshape(1).astype(dtype)   # SMEM scalar
    b1d = b.reshape(1).astype(dtype)   # SMEM scalar

    y2d = pl.pallas_call(
        linear1x1_kernel,
        out_shape=jax.ShapeDtypeStruct((rows, _LANES), dtype),
        grid=grid,
        in_specs=[
            pl.BlockSpec(memory_space=pltpu.MemorySpace.SMEM),   # w scalar
            pl.BlockSpec(memory_space=pltpu.MemorySpace.SMEM),   # b scalar
            pl.BlockSpec((br, _LANES), lambda i: (i, 0)),        # x tile
        ],
        out_specs=pl.BlockSpec((br, _LANES), lambda i: (i, 0)),  # out tile
        compiler_params=pltpu.CompilerParams(
            dimension_semantics=("parallel",),
        ),
    )(w1d, b1d, x2d)

    yf = y2d.reshape(-1)
    if padded:
        yf = yf[:n]   # padded tail holds b, drop it before returning
    return yf.reshape(n, out_f)


if __name__ == "__main__":
    key = jax.random.PRNGKey(0)
    kx, kw, kb, kx2, kx3 = jax.random.split(key, 5)

    # Deterministic parameters mimicking nn.Linear(1, 1) init (fan_in = 1).
    w = jax.random.uniform(kw, (1, 1), dtype=jnp.float32, minval=-1.0, maxval=1.0)
    b = jax.random.uniform(kb, (1,), dtype=jnp.float32, minval=-1.0, maxval=1.0)

    # Main check: small batch implied by the module, kernel path forced.
    batch = 8
    x = jax.random.normal(kx, (batch, 1), dtype=jnp.float32)
    out = jax.block_until_ready(linear_forward(x, w, b, force_kernel=True))
    ref = x @ w.T + b
    assert out.shape == (batch, 1)
    assert jnp.allclose(out, ref, atol=1e-5, rtol=1e-5)

    # Unaligned N (N % 128 != 0): exercises the pad + tail-slice path.
    x2 = jax.random.normal(kx2, (300, 1), dtype=jnp.float32)
    out2 = jax.block_until_ready(linear_forward(x2, w, b, force_kernel=True))
    assert jnp.allclose(out2, x2 @ w.T + b, atol=1e-5, rtol=1e-5)

    # Multi-block grid with a ragged last block (rows=25, block_rows=8).
    x3 = jax.random.normal(kx3, (3100, 1), dtype=jnp.float32)
    out3 = jax.block_until_ready(
        linear_forward(x3, w, b, block_rows=8, force_kernel=True))
    assert jnp.allclose(out3, x3 @ w.T + b, atol=1e-5, rtol=1e-5)

    print("KERNEL_OK")
</pallas_src>

<mosaic_0001>
module attributes {stable_mosaic.version = 11 : i64} {
  func.func @linear1x1_kernel(%arg0: i32, %arg1: memref<1xf32, #tpu.memory_space<smem>>, %arg2: memref<1xf32, #tpu.memory_space<smem>>, %arg3: memref<1x128xf32, #tpu.memory_space<vmem>>, %arg4: memref<1x128xf32, #tpu.memory_space<vmem>>) attributes {dimension_semantics = [#tpu.dimension_semantics<parallel>], iteration_bounds = array<i64: 1>, scalar_prefetch = 0 : i64, scratch_operands = 0 : i64, tpu.core_type = #tpu.core_type<tc>, window_params = [{transform_indices = @transform_0, window_bounds = array<i64: 1>}, {transform_indices = @transform_1, window_bounds = array<i64: 1>}, {transform_indices = @transform_2, window_bounds = array<i64: 1, 128>}, {transform_indices = @transform_3, window_bounds = array<i64: 1, 128>}]} {
    %c0 = arith.constant 0 : index
    %c0_0 = arith.constant 0 : index
    %0 = vector.load %arg3[%c0, %c0_0] : memref<1x128xf32, #tpu.memory_space<vmem>>, vector<1x128xf32>
    %c0_1 = arith.constant 0 : index
    %1 = memref.load %arg1[%c0_1] : memref<1xf32, #tpu.memory_space<smem>>
    %2 = vector.broadcast %1 : f32 to vector<1x128xf32>
    %3 = arith.mulf %0, %2 : vector<1x128xf32>
    %c0_2 = arith.constant 0 : index
    %4 = memref.load %arg2[%c0_2] : memref<1xf32, #tpu.memory_space<smem>>
    %5 = vector.broadcast %4 : f32 to vector<1x128xf32>
    %6 = arith.addf %3, %5 : vector<1x128xf32>
    %c0_3 = arith.constant 0 : index
    %c0_4 = arith.constant 0 : index
    %7 = vector.load %arg4[%c0_3, %c0_4] : memref<1x128xf32, #tpu.memory_space<vmem>>, vector<1x128xf32>
    tpu.vector_store %arg4[%c0_3, %c0_4], %6 {strides = array<i32>} : memref<1x128xf32, #tpu.memory_space<vmem>>, vector<1x128xf32>,
    return
  }
  func.func @transform_0(%arg0: i32) -> i32 {
    %c0_i32 = arith.constant 0 : i32
    %c0_i32_0 = arith.constant 0 : i32
    return %c0_i32 : i32
  }
  func.func @transform_1(%arg0: i32) -> i32 {
    %c0_i32 = arith.constant 0 : i32
    %c0_i32_0 = arith.constant 0 : i32
    return %c0_i32 : i32
  }
  func.func @transform_2(%arg0: i32) -> (i32, i32) {
    %c0_i32 = arith.constant 0 : i32
    %c0_i32_0 = arith.constant 0 : i32
    return %arg0, %c0_i32 : i32, i32
  }
  func.func @transform_3(%arg0: i32) -> (i32, i32) {
    %c0_i32 = arith.constant 0 : i32
    %c0_i32_0 = arith.constant 0 : i32
    return %arg0, %c0_i32 : i32, i32
  }
}

</mosaic_0001>

<llo_original>
// kernel: tpu_custom_call.1
$region0: #{tpu_custom_call.1}
  #allocation0 [shape = 'u32[]', space=smem, size = 0x4, offset = 0x4, fixed_abs, tag = 'smem constant byte address 0x4 - core index']
  #allocation1 [shape = 'u32[72,128]{1,0:T(1,128)}', space=vmem, size = 0x9000, scoped, tag = 'internal scratch']
  #allocation2 [shape = 'f32[1]{0:T(128)S(6)}', space=smem, size = 0x200, scoped, tag = 'scoped memory for tpu_custom_call.1']
  #allocation3 [shape = 'f32[1]{0:T(128)S(6)}', space=smem, size = 0x200, scoped, tag = 'scoped memory for tpu_custom_call.1']
  %s0 = inlined_call_operand.<no memory space> [shape: f32[1], index: 0, kind: input, shape index: {}]
  %s1 = inlined_call_operand.<no memory space> [shape: f32[1], index: 1, kind: input, shape index: {}]
  %s2 = inlined_call_operand.vmem [shape: f32[1,128], index: 2, kind: input, shape index: {}]
  %s3 = inlined_call_operand.hbm [shape: f32[1,128], index: 3, kind: output, shape index: {}]
  %s4 = sld [smem:[#allocation0]]
  $region22: #{tpu_custom_call.1} parent=0
    _
  %s6 = ssub.s32 1, %s4
  %s7 = scalar_select 0, %s6, %s4
  %8 = sst [smem:[#allocation2]] %s0
  %9 = sst [smem:[#allocation3]] %s1
  $region1: #{tpu_custom_call.1} parent=0
    #allocation4 [shape = 'u8[512]{0}', space=vmem, size = 0x400, scoped, tag = 'output window, operand 0, single buffered']
    #allocation5 [shape = 's32[1]{0}', space=sflag, size = 0x4, scoped, tag = 'scoped memory for tpu_custom_call.1']
    %10 = vsyncpa [#allocation5], 0
    // Predicated region
    $region2: #{tpu_custom_call.1} parent=1 // pred_check
      _
    $region3: #{tpu_custom_call.1} parent=1 // pred_check_branch
      %12 = sbr.rel (0) target = $region5
    $region4: #{tpu_custom_call.1} parent=1 // pred_region
      _
    $region5: #{tpu_custom_call.1} parent=1 // pred_fallthru
      _
    // Predicated region
    $region6: #{tpu_custom_call.1} parent=1 // pred_check
      _
    $region7: #{tpu_custom_call.1} parent=1 // pred_check_branch
      %14 = sbr.rel (0) target = $region9
    $region8: #{tpu_custom_call.1} parent=1 // pred_region
      _
    $region9: #{tpu_custom_call.1} parent=1 // pred_fallthru
      _
    // Predicated region
    $region10: #{tpu_custom_call.1} parent=1 // pred_check
      _
    $region11: #{tpu_custom_call.1} parent=1 // pred_check_branch
      %16 = sbr.rel (0) target = $region13
    $region12: #{tpu_custom_call.1} parent=1 // pred_region
      _
    $region13: #{tpu_custom_call.1} parent=1 // pred_fallthru
      _
    %v17 = vld [vmem:[%s2] sm:$0x1]
    %s18 = sld [smem:[#allocation2]]
    %v19 = vstv %s18
    %v20 = vmul.f32 %v17, %v19
    %s21 = sld [smem:[#allocation3]]
    %v22 = vstv %s21
    %v23 = vadd.f32 %v20, %v22
    %24 = vst [vmem:[#allocation4] sm:$0x1] %v23
    // Predicated region
    $region14: #{tpu_custom_call.1} parent=1 // pred_check
      _
    $region15: #{tpu_custom_call.1} parent=1 // pred_check_branch
      %26 = sbr.rel (0) target = $region17
    $region16: #{tpu_custom_call.1} parent=1 // pred_region
      %28 = vsyncadd [#allocation5], 0
      %s30 = sshll.u32 [#allocation4], 4
      %s31 = int_to_ptr.vmem [resolvable:$true] %s30
      %s32 = sshll.u32 %s3, 4
      %s33 = int_to_ptr.hbm [resolvable:$true] %s32
      %35 = dma.vmem_to_hbm [thread:$0]  %s31, 16, %s33, [#allocation5]
    $region17: #{tpu_custom_call.1} parent=1 // pred_fallthru
      _
    // Predicated region
    $region18: #{tpu_custom_call.1} parent=1 // pred_check
      _
    $region19: #{tpu_custom_call.1} parent=1 // pred_check_branch
      %37 = sbr.rel (0) target = $region21
    $region20: #{tpu_custom_call.1} parent=1 // pred_region
      %39 = dma.done [#allocation5], 16
    $region21: #{tpu_custom_call.1} parent=1 // pred_fallthru
      _
    %40 = vsyncpa [#allocation5], 1

</llo_original>
